<compile_context>
chip_gen: v6e
topology: v6e:2x2x1
jax: 0.10.0
libtpu: 0.0.40
codegen_flags: <defaults>
</compile_context>

<pallas_src>
import math

import jax
import jax.numpy as jnp
from jax.experimental import pallas as pl
from jax.experimental.pallas import tpu as pltpu


def _make_label_smoothing_kernel(*, size, n_total, padding_idx, confidence, smooth_val,
                                 row_const, tile_n, tile_v, mask_rows, mask_cols,
                                 with_true_dist):
    def kernel(x_ref, tgt_ref, *out_refs):
        if with_true_dist:
            td_ref, loss_ref = out_refs
        else:
            (loss_ref,) = out_refs

        i = pl.program_id(0)
        j = pl.program_id(1)

        x = x_ref[...].astype(jnp.float32)            # (TILE_N, TILE_V) f32 log-probs
        tgt = tgt_ref[...]                            # (TILE_N, 1) int32

        # Global column index of every lane in this V tile.
        col = jax.lax.broadcasted_iota(jnp.int32, (tile_n, tile_v), 1) + j * tile_v

        row_valid = tgt != padding_idx                # (TILE_N, 1)
        if mask_rows:                                 # only emitted when N % TILE_N != 0
            row = jax.lax.broadcasted_iota(jnp.int32, (tile_n, 1), 0) + i * tile_n
            row_valid = row_valid & (row < n_total)

        valid = row_valid & (col != padding_idx)      # (TILE_N, TILE_V)
        if mask_cols:                                 # only emitted when V % TILE_V != 0
            valid = valid & (col < size)

        # Fused construction: one select for confidence-vs-smoothing, one for zeroing.
        td = jnp.where(col == tgt, jnp.float32(confidence), jnp.float32(smooth_val))
        td = jnp.where(valid, td, jnp.float32(0.0))

        if mask_rows or mask_cols:
            # The padded region of a ragged block holds unspecified data; scrub x so
            # that 0 * garbage can never produce NaN/Inf.  Wherever td == 0 the product
            # is 0 regardless of x, so this does not change the result.
            x = jnp.where(valid, x, jnp.float32(0.0))

        if with_true_dist:
            td_ref[...] = td.astype(td_ref.dtype)

        # -sum_j td * x for this V tile, per row (cross-lane reduce -> XLU slot).
        row_part = -jnp.sum(td * x, axis=1, keepdims=True)   # (TILE_N, 1)

        @pl.when(j == 0)
        def _init():
            # sum_j t*log(t) per row is a compile-time constant for non-padded rows.
            loss_ref[...] = jnp.where(row_valid, jnp.float32(row_const), jnp.float32(0.0))

        loss_ref[...] += row_part

    return kernel


def _pick_tiles(n, v, max_tile_n=256, max_tile_v=2048):
    # Full-extent blocks are always legal; otherwise 256 / 2048 are (8, 128)-aligned
    # and small enough (2 MiB f32) to fit the scoped-VMEM defaults of v5e/v6e/v7x
    # once double-buffered for both x and true_dist.
    tile_n = n if n <= max_tile_n else max_tile_n
    tile_v = v if v <= max_tile_v else max_tile_v
    return tile_n, tile_v


def label_smoothing_forward(x, target, *, size, padding_idx, smoothing=0.0,
                            tile_n=None, tile_v=None, return_true_dist=True):
    """Returns (loss, true_dist) matching LabelSmoothing.forward.

    x:      (N, size) float log-probabilities (f32 or bf16 -- passed through as-is).
    target: (N,) integer class indices.
    If return_true_dist=False, true_dist is not materialized (halves HBM traffic)
    and None is returned in its place.
    """
    assert x.ndim == 2 and x.shape[1] == size
    n, v = x.shape
    tgt2d = target.astype(jnp.int32).reshape(n, 1)

    auto_tn, auto_tv = _pick_tiles(n, v)
    tile_n = auto_tn if tile_n is None else tile_n
    tile_v = auto_tv if tile_v is None else tile_v

    confidence = 1.0 - smoothing
    smooth_val = smoothing / (size - 2)
    # Closed-form per-row sum_j t*log(t) for a non-padded row (0*log0 := 0).
    row_const = 0.0
    if confidence > 0.0:
        row_const += confidence * math.log(confidence)
    if smooth_val > 0.0:
        row_const += (size - 2) * smooth_val * math.log(smooth_val)

    grid = (pl.cdiv(n, tile_n), pl.cdiv(v, tile_v))
    mask_rows = (n % tile_n) != 0
    mask_cols = (v % tile_v) != 0

    kernel = _make_label_smoothing_kernel(
        size=size, n_total=n, padding_idx=padding_idx, confidence=confidence,
        smooth_val=smooth_val, row_const=row_const, tile_n=tile_n, tile_v=tile_v,
        mask_rows=mask_rows, mask_cols=mask_cols, with_true_dist=return_true_dist)

    out_shape = []
    out_specs = []
    if return_true_dist:
        out_shape.append(jax.ShapeDtypeStruct((n, v), x.dtype))
        out_specs.append(pl.BlockSpec((tile_n, tile_v), lambda i, j: (i, j)))
    # Per-row loss partials; accumulated in-place across the V ("arbitrary") grid axis.
    out_shape.append(jax.ShapeDtypeStruct((n, 1), jnp.float32))
    out_specs.append(pl.BlockSpec((tile_n, 1), lambda i, j: (i, 0)))

    outs = pl.pallas_call(
        kernel,
        grid=grid,
        in_specs=[
            pl.BlockSpec((tile_n, tile_v), lambda i, j: (i, j)),
            pl.BlockSpec((tile_n, 1), lambda i, j: (i, 0)),
        ],
        out_specs=tuple(out_specs),
        out_shape=tuple(out_shape),
        compiler_params=pltpu.CompilerParams(
            # N tiles are independent (per-row partials -> safe to shard across cores);
            # the V axis carries the per-row loss accumulator, so it stays "arbitrary".
            dimension_semantics=("parallel", "arbitrary")),
    )(x, tgt2d)

    if return_true_dist:
        true_dist, loss_rows = outs
    else:
        (loss_rows,) = outs
        true_dist = None

    loss = jnp.sum(loss_rows)
    return loss, true_dist


if __name__ == "__main__":
    key = jax.random.PRNGKey(0)
    kx, kt = jax.random.split(key)

    # Small but deliberately ragged vs. the (8, 128)-aligned tiles, so the run
    # exercises the 2-D grid, the cross-V-tile accumulation and the edge masking.
    N, V = 12, 300
    padding_idx = 0
    smoothing = 0.1
    TILE_N, TILE_V = 8, 128

    logits = jax.random.normal(kx, (N, V), dtype=jnp.float32)
    x = jax.nn.log_softmax(logits, axis=-1)             # KLDivLoss expects log-probs
    target = jax.random.randint(kt, (N,), 0, V, dtype=jnp.int32)
    target = target.at[3].set(padding_idx)              # include a padded row

    loss, true_dist = label_smoothing_forward(
        x, target, size=V, padding_idx=padding_idx, smoothing=smoothing,
        tile_n=TILE_N, tile_v=TILE_V)
    loss_only, td_none = label_smoothing_forward(
        x, target, size=V, padding_idx=padding_idx, smoothing=smoothing,
        tile_n=TILE_N, tile_v=TILE_V, return_true_dist=False)
    jax.block_until_ready((loss, true_dist, loss_only))

    # Pure-JAX reference.
    smooth_val = smoothing / (V - 2)
    confidence = 1.0 - smoothing
    col = jnp.arange(V)[None, :]
    td_ref = jnp.full((N, V), smooth_val, jnp.float32)
    td_ref = jnp.where(col == target[:, None], confidence, td_ref)
    td_ref = jnp.where(col == padding_idx, 0.0, td_ref)
    td_ref = jnp.where(target[:, None] == padding_idx, 0.0, td_ref)
    pw = jnp.where(td_ref > 0, td_ref * (jnp.log(jnp.maximum(td_ref, 1e-30)) - x), 0.0)
    loss_ref = jnp.sum(pw)

    assert td_none is None
    assert jnp.allclose(true_dist, td_ref, atol=1e-6), "true_dist mismatch"
    assert jnp.allclose(loss, loss_ref, rtol=1e-4, atol=1e-4), "loss mismatch"
    assert jnp.allclose(loss_only, loss_ref, rtol=1e-4, atol=1e-4), "loss (no true_dist) mismatch"

    print("KERNEL_OK")
</pallas_src>

<mosaic_0001>
module attributes {stable_mosaic.version = 11 : i64} {
  func.func @kernel(%arg0: i32, %arg1: i32, %arg2: memref<8x128xf32, #tpu.memory_space<vmem>>, %arg3: memref<8x1xi32, #tpu.memory_space<vmem>>, %arg4: memref<8x128xf32, #tpu.memory_space<vmem>>, %arg5: memref<8x1xf32, #tpu.memory_space<vmem>>) attributes {dimension_semantics = [#tpu.dimension_semantics<parallel>, #tpu.dimension_semantics<arbitrary>], iteration_bounds = array<i64: 2, 3>, scalar_prefetch = 0 : i64, scratch_operands = 0 : i64, tpu.core_type = #tpu.core_type<tc>, window_params = [{transform_indices = @transform_0, window_bounds = array<i64: 8, 128>}, {transform_indices = @transform_1, window_bounds = array<i64: 8, 1>}, {transform_indices = @transform_2, window_bounds = array<i64: 8, 128>}, {transform_indices = @transform_3, window_bounds = array<i64: 8, 1>}]} {
    %c0 = arith.constant 0 : index
    %c0_0 = arith.constant 0 : index
    %0 = vector.load %arg2[%c0, %c0_0] : memref<8x128xf32, #tpu.memory_space<vmem>>, vector<8x128xf32>
    %c0_1 = arith.constant 0 : index
    %c0_2 = arith.constant 0 : index
    %1 = vector.load %arg3[%c0_1, %c0_2] : memref<8x1xi32, #tpu.memory_space<vmem>>, vector<8x1xi32>
    %2 = tpu.iota {dimensions = array<i32: 1>} : vector<8x128xi32>
    %c128_i32 = arith.constant 128 : i32
    %3 = arith.muli %arg1, %c128_i32 : i32
    %4 = vector.broadcast %3 : i32 to vector<8x128xi32>
    %5 = arith.addi %2, %4 : vector<8x128xi32>
    %c0_i32 = arith.constant 0 : i32
    %6 = vector.broadcast %c0_i32 : i32 to vector<8x1xi32>
    %7 = arith.cmpi ne, %1, %6 : vector<8x1xi32>
    %8 = tpu.iota {dimensions = array<i32: 0>} : vector<8x1xi32>
    %c8_i32 = arith.constant 8 : i32
    %9 = arith.muli %arg0, %c8_i32 : i32
    %10 = vector.broadcast %9 : i32 to vector<8x1xi32>
    %11 = arith.addi %8, %10 : vector<8x1xi32>
    %c12_i32 = arith.constant 12 : i32
    %12 = vector.broadcast %c12_i32 : i32 to vector<8x1xi32>
    %13 = arith.cmpi slt, %11, %12 : vector<8x1xi32>
    %14 = arith.andi %7, %13 : vector<8x1xi1>
    %c0_i32_3 = arith.constant 0 : i32
    %15 = vector.broadcast %c0_i32_3 : i32 to vector<8x128xi32>
    %16 = arith.cmpi ne, %5, %15 : vector<8x128xi32>
    %17 = vector.broadcast %14 : vector<8x1xi1> to vector<8x128xi1>
    %18 = arith.andi %17, %16 : vector<8x128xi1>
    %c300_i32 = arith.constant 300 : i32
    %19 = vector.broadcast %c300_i32 : i32 to vector<8x128xi32>
    %20 = arith.cmpi slt, %5, %19 : vector<8x128xi32>
    %21 = arith.andi %18, %20 : vector<8x128xi1>
    %22 = vector.broadcast %1 : vector<8x1xi32> to vector<8x128xi32>
    %23 = arith.cmpi eq, %5, %22 : vector<8x128xi32>
    %cst = arith.constant 0.899999976 : f32
    %cst_4 = arith.constant 3.35570483E-4 : f32
    %24 = vector.broadcast %cst : f32 to vector<8x128xf32>
    %25 = vector.broadcast %cst_4 : f32 to vector<8x128xf32>
    %26 = arith.select %23, %24, %25 : vector<8x128xi1>, vector<8x128xf32>
    %cst_5 = arith.constant 0.000000e+00 : f32
    %27 = vector.broadcast %cst_5 : f32 to vector<8x128xf32>
    %28 = arith.select %21, %26, %27 : vector<8x128xi1>, vector<8x128xf32>
    %cst_6 = arith.constant 0.000000e+00 : f32
    %29 = vector.broadcast %cst_6 : f32 to vector<8x128xf32>
    %30 = arith.select %21, %0, %29 : vector<8x128xi1>, vector<8x128xf32>
    %c0_7 = arith.constant 0 : index
    %c0_8 = arith.constant 0 : index
    %31 = vector.load %arg4[%c0_7, %c0_8] : memref<8x128xf32, #tpu.memory_space<vmem>>, vector<8x128xf32>
    tpu.vector_store %arg4[%c0_7, %c0_8], %28 {strides = array<i32>} : memref<8x128xf32, #tpu.memory_space<vmem>>, vector<8x128xf32>,
    %32 = arith.mulf %28, %30 : vector<8x128xf32>
    %cst_9 = arith.constant dense<0.000000e+00> : vector<8xf32>
    %33 = vector.multi_reduction <add>, %32, %cst_9 [1] : vector<8x128xf32> to vector<8xf32>
    %34 = vector.shape_cast %33 : vector<8xf32> to vector<8x1xf32>
    %cst_10 = arith.constant 0.000000e+00 : f32
    %35 = vector.broadcast %cst_10 : f32 to vector<8x1xf32>
    %36 = arith.subf %35, %34 : vector<8x1xf32>
    %c0_i32_11 = arith.constant 0 : i32
    %37 = arith.cmpi eq, %arg1, %c0_i32_11 : i32
    %38 = arith.extui %37 : i1 to i32
    %c0_i32_12 = arith.constant 0 : i32
    %39 = arith.cmpi ne, %38, %c0_i32_12 : i32
    scf.if %39 {
      %cst_17 = arith.constant -0.894792318 : f32
      %cst_18 = arith.constant 0.000000e+00 : f32
      %43 = vector.broadcast %cst_17 : f32 to vector<8x1xf32>
      %44 = vector.broadcast %cst_18 : f32 to vector<8x1xf32>
      %45 = arith.select %14, %43, %44 : vector<8x1xi1>, vector<8x1xf32>
      %c0_19 = arith.constant 0 : index
      %c0_20 = arith.constant 0 : index
      %46 = vector.load %arg5[%c0_19, %c0_20] : memref<8x1xf32, #tpu.memory_space<vmem>>, vector<8x1xf32>
      tpu.vector_store %arg5[%c0_19, %c0_20], %45 {strides = array<i32>} : memref<8x1xf32, #tpu.memory_space<vmem>>, vector<8x1xf32>,
    } else {
    }
    %c0_13 = arith.constant 0 : index
    %c0_14 = arith.constant 0 : index
    %40 = vector.load %arg5[%c0_13, %c0_14] : memref<8x1xf32, #tpu.memory_space<vmem>>, vector<8x1xf32>
    %41 = arith.addf %40, %36 : vector<8x1xf32>
    %c0_15 = arith.constant 0 : index
    %c0_16 = arith.constant 0 : index
    %42 = vector.load %arg5[%c0_15, %c0_16] : memref<8x1xf32, #tpu.memory_space<vmem>>, vector<8x1xf32>
    tpu.vector_store %arg5[%c0_15, %c0_16], %41 {strides = array<i32>} : memref<8x1xf32, #tpu.memory_space<vmem>>, vector<8x1xf32>,
    return
  }
  func.func @transform_0(%arg0: i32, %arg1: i32) -> (i32, i32) {
    %c0_i32 = arith.constant 0 : i32
    return %arg0, %arg1 : i32, i32
  }
  func.func @transform_1(%arg0: i32, %arg1: i32) -> (i32, i32) {
    %c0_i32 = arith.constant 0 : i32
    %c0_i32_0 = arith.constant 0 : i32
    return %arg0, %c0_i32 : i32, i32
  }
  func.func @transform_2(%arg0: i32, %arg1: i32) -> (i32, i32) {
    %c0_i32 = arith.constant 0 : i32
    return %arg0, %arg1 : i32, i32
  }
  func.func @transform_3(%arg0: i32, %arg1: i32) -> (i32, i32) {
    %c0_i32 = arith.constant 0 : i32
    %c0_i32_0 = arith.constant 0 : i32
    return %arg0, %c0_i32 : i32, i32
  }
}

</mosaic_0001>

<llo_original>
// kernel: tpu_custom_call.1
$region0: #{tpu_custom_call.1}
  #allocation0 [shape = 'u32[]', space=smem, size = 0x4, offset = 0x4, fixed_abs, tag = 'smem constant byte address 0x4 - core index']
  #allocation1 [shape = 'u32[144,128]{1,0:T(1,128)}', space=vmem, size = 0x12000, scoped, tag = 'internal scratch']
  %s0 = inlined_call_operand.hbm [shape: f32[12,300], index: 0, kind: input, shape index: {}]
  %s1 = inlined_call_operand.vmem [shape: s32[12,1], index: 1, kind: input, shape index: {}]
  %s2 = inlined_call_operand.hbm [shape: f32[12,300], index: 2, kind: output, shape index: {0}]
  %s3 = inlined_call_operand.vmem [shape: f32[12,1], index: 3, kind: output, shape index: {1}]
  %4 = xla_tuple %s2, %s3
  %s5 = sld [smem:[#allocation0]]
  $region57: #{tpu_custom_call.1} parent=0
    _
  %s7 = ssub.s32 1, %s5
  %s8 = scalar_select 0, %s7, %s5
  $region1: #{tpu_custom_call.1} parent=0
    #allocation2 [shape = 'u8[8192]{0}', space=vmem, size = 0x2000, scoped, tag = 'input window, operand 0']
    #allocation3 [shape = 's32[2]{0}', space=sflag, size = 0x8, scoped, tag = 'scoped memory for tpu_custom_call.1']
    #allocation4 [shape = 's32[2]{0}', space=sflag, size = 0x8, scoped, tag = 'scoped memory for tpu_custom_call.1']
    #allocation5 [shape = 'u8[8192]{0}', space=vmem, size = 0x2000, scoped, tag = 'output window, operand 0']
    %9 = vsyncpa [#allocation3], 0
    %s10 = scalar_lea.sflag [#allocation3], 1
    %11 = vsyncpa %s10, 0
    %12 = vsyncpa [#allocation4], 0
    %s13 = scalar_lea.sflag [#allocation4], 1
    %14 = vsyncpa %s13, 0
    loop: start=0, step=1, limit=8
    $region2: #{tpu_custom_call.1} parent=1 // loop_pre_header
      _
    $region3: #{tpu_custom_call.1} parent=1 // loop_header
      %s16 = sphi 0, %s20
      %p17 = scmp.ge.s32.totalorder %s16, 8
      %s23 = sphi 0, %s35
      %s24 = sphi 0, %s31
      %s25 = sphi 0, %s23
      %s26 = sphi 0, %s24
      %s27 = sphi 0, %s25
      %s28 = sphi 0, %s26
      %s40 = sphi 0, %s42
      %s43 = sphi 0, %s40
      %s44 = sphi 0, %s43
      %s60 = sphi 0, %s44
      %s66 = sphi 0, %s68
      %s69 = sphi 0, %s66
      %s70 = sphi 0, %s69
      %s86 = sphi 0, %s70
      %s94 = sphi 0, %s96
      %s97 = sphi 0, %s94
      %s98 = sphi 0, %s97
      %s114 = sphi 0, %s98
      %s120 = sphi 0, %s122
      %s123 = sphi 0, %s120
      %s124 = sphi 0, %s123
      %s140 = sphi 0, %s124
    $region4: #{tpu_custom_call.1} parent=1 // loop_header_branch
      %19 = sbr.rel (%p17) target = $region8
    $region5: #{tpu_custom_call.1} parent=1 // loop_body
      %s21 = ssub.s32 %s16, 1
      %s22 = ssub.s32 %s16, 2
      %s29 = sadd.s32 1, %s24
      %p30 = scmp.ge.s32.totalorder %s29, 3
      %s31 = scalar_select %p30, 0, %s29
      %s32 = sadd.s32 1, %s23
      %s33 = scalar_select %p30, %s32, %s23
      %p34 = scmp.ge.s32.totalorder %s33, 2
      %s35 = scalar_select %p34, 0, %s33
      %s36 = ssub.s32 %s23, %s35
      %s37 = ssub.s32 %s24, %s31
      %s38 = sor.u32 %s36, %s37
      %p39 = scmp.eq.s32.totalorder %s38, 0
      %s41 = sadd.s32 %s40, 1
      %s42 = scalar_select %p39, %s40, %s41
      %p45 = pneg %p39
      %p46 = scmp.eq.s32.totalorder %s16, 5
      %p47 = por %p45, %p46
      %p48 = scmp.ne.s32.totalorder %s40, %s43
      %p49 = scmp.eq.s32.totalorder %s16, 0
      %p50 = por %p48, %p49
      %p51 = scmp.ne.s32.totalorder %s40, %s43
      %p52 = scmp.eq.s32.totalorder %s21, 5
      %p53 = por %p51, %p52
      %p54 = scmp.ne.s32.totalorder %s43, %s44
      %p55 = scmp.eq.s32.totalorder %s21, 0
      %p56 = por %p54, %p55
      %p57 = scmp.ne.s32.totalorder %s43, %s44
      %p58 = scmp.eq.s32.totalorder %s22, 5
      %p59 = por %p57, %p58
      %p61 = scmp.ne.s32.totalorder %s44, %s60
      %p62 = scmp.eq.s32.totalorder %s22, 0
      %p63 = por %p61, %p62
      %s64 = ssub.s32 %s23, %s35
      %p65 = scmp.eq.s32.totalorder %s64, 0
      %s67 = sadd.s32 %s66, 1
      %s68 = scalar_select %p65, %s66, %s67
      %p71 = pneg %p65
      %p72 = scmp.eq.s32.totalorder %s16, 5
      %p73 = por %p71, %p72
      %p74 = scmp.ne.s32.totalorder %s66, %s69
      %p75 = scmp.eq.s32.totalorder %s16, 0
      %p76 = por %p74, %p75
      %p77 = scmp.ne.s32.totalorder %s66, %s69
      %p78 = scmp.eq.s32.totalorder %s21, 5
      %p79 = por %p77, %p78
      %p80 = scmp.ne.s32.totalorder %s69, %s70
      %p81 = scmp.eq.s32.totalorder %s21, 0
      %p82 = por %p80, %p81
      %p83 = scmp.ne.s32.totalorder %s69, %s70
      %p84 = scmp.eq.s32.totalorder %s22, 5
      %p85 = por %p83, %p84
      %p87 = scmp.ne.s32.totalorder %s70, %s86
      %p88 = scmp.eq.s32.totalorder %s22, 0
      %p89 = por %p87, %p88
      %s90 = ssub.s32 %s23, %s35
      %s91 = ssub.s32 %s24, %s31
      %s92 = sor.u32 %s90, %s91
      %p93 = scmp.eq.s32.totalorder %s92, 0
      %s95 = sadd.s32 %s94, 1
      %s96 = scalar_select %p93, %s94, %s95
      %p99 = pneg %p93
      %p100 = scmp.eq.s32.totalorder %s16, 5
      %p101 = por %p99, %p100
      %p102 = scmp.ne.s32.totalorder %s94, %s97
      %p103 = scmp.eq.s32.totalorder %s16, 0
      %p104 = por %p102, %p103
      %p105 = scmp.ne.s32.totalorder %s94, %s97
      %p106 = scmp.eq.s32.totalorder %s21, 5
      %p107 = por %p105, %p106
      %p108 = scmp.ne.s32.totalorder %s97, %s98
      %p109 = scmp.eq.s32.totalorder %s21, 0
      %p110 = por %p108, %p109
      %p111 = scmp.ne.s32.totalorder %s97, %s98
      %p112 = scmp.eq.s32.totalorder %s22, 5
      %p113 = por %p111, %p112
      %p115 = scmp.ne.s32.totalorder %s98, %s114
      %p116 = scmp.eq.s32.totalorder %s22, 0
      %p117 = por %p115, %p116
      %s118 = ssub.s32 %s23, %s35
      %p119 = scmp.eq.s32.totalorder %s118, 0
      %s121 = sadd.s32 %s120, 1
      %s122 = scalar_select %p119, %s120, %s121
      %p125 = pneg %p119
      %p126 = scmp.eq.s32.totalorder %s16, 5
      %p127 = por %p125, %p126
      %p128 = scmp.ne.s32.totalorder %s120, %s123
      %p129 = scmp.eq.s32.totalorder %s16, 0
      %p130 = por %p128, %p129
      %p131 = scmp.ne.s32.totalorder %s120, %s123
      %p132 = scmp.eq.s32.totalorder %s21, 5
      %p133 = por %p131, %p132
      %p134 = scmp.ne.s32.totalorder %s123, %s124
      %p135 = scmp.eq.s32.totalorder %s21, 0
      %p136 = por %p134, %p135
      %p137 = scmp.ne.s32.totalorder %s123, %s124
      %p138 = scmp.eq.s32.totalorder %s22, 5
      %p139 = por %p137, %p138
      %p141 = scmp.ne.s32.totalorder %s124, %s140
      %p142 = scmp.eq.s32.totalorder %s22, 0
      %p143 = por %p141, %p142
      %p144 = scmp.le.s32.totalorder 1, %s16
      %p145 = scmp.lt.s32.totalorder %s16, 7
      %p146 = pnand %p144, %p145
      %p147 = pneg %p146
      // Predicated region
      $region9: #{tpu_custom_call.1} parent=5 // pred_check
        _
      $region10: #{tpu_custom_call.1} parent=5 // pred_check_branch
        %149 = sbr.rel (%p146) target = $region12
      $region11: #{tpu_custom_call.1} parent=5 // pred_region
        %s150 = ssub.s32 %s16, 1
      $region12: #{tpu_custom_call.1} parent=5 // pred_fallthru
        _
      %p151 = scmp.lt.s32.totalorder %s16, 6
      // Predicated region
      $region13: #{tpu_custom_call.1} parent=5 // pred_check
        %p152 = pneg %p151
      $region14: #{tpu_custom_call.1} parent=5 // pred_check_branch
        %154 = sbr.rel (%p152) target = $region16
      $region15: #{tpu_custom_call.1} parent=5 // pred_region
        // Predicated region
        $region17: #{tpu_custom_call.1} parent=15 // pred_check
          %p155 = pneg %p50
        $region18: #{tpu_custom_call.1} parent=15 // pred_check_branch
          %157 = sbr.rel (%p155) target = $region20
        $region19: #{tpu_custom_call.1} parent=15 // pred_region
          %s158 = sand.u32 %s40, 1
          %s159 = scalar_lea.sflag [#allocation3], %s158
          %s160 = sand.u32 %s40, 1
          %s161 = smul.addr %s160, 8
          %s162 = scalar_lea.vmem [#allocation2], %s161
          %s164 = ssub.s32 128, 128
          %165 = vsyncadd %s159, %s164
          %s166 = smul.addr %s23, 3
          %s167 = sadd.s32 %s24, %s166
          %s168 = smul.addr %s167, 128
          %s169 = scalar_lea.hbm %s0, %s168
          %s171 = sshll.u32 %s162, 4
          %s172 = int_to_ptr.vmem [resolvable:$true] %s171
          %174 = dma.hbm_to_vmem [thread:$0]  %s169, 128, %s172, %s159
        $region20: #{tpu_custom_call.1} parent=15 // pred_fallthru
          _
        // Predicated region
        $region21: #{tpu_custom_call.1} parent=15 // pred_check
          %p175 = pneg %p76
        $region22: #{tpu_custom_call.1} parent=15 // pred_check_branch
          %177 = sbr.rel (%p175) target = $region24
        $region23: #{tpu_custom_call.1} parent=15 // pred_region
          %p178 = scmp.lt.s32.totalorder %s23, 1
          %s179 = scalar_select %p178, %s23, 1
          %s180 = smul.addr %s179, 8
          %s181 = scalar_lea.vmem %s1, %s180
        $region24: #{tpu_custom_call.1} parent=15 // pred_fallthru
          _
      $region16: #{tpu_custom_call.1} parent=5 // pred_fallthru
        _
      %p182 = scmp.le.s32.totalorder 1, %s16
      %p183 = scmp.lt.s32.totalorder %s16, 7
      %p184 = pnand %p182, %p183
      %p185 = pneg %p184
      // Predicated region
      $region25: #{tpu_custom_call.1} parent=5 // pred_check
        _
      $region26: #{tpu_custom_call.1} parent=5 // pred_check_branch
        %187 = sbr.rel (%p184) target = $region28
      $region27: #{tpu_custom_call.1} parent=5 // pred_region
        %s188 = ssub.s32 %s16, 1
        %s189 = sand.u32 %s43, 1
        %s190 = scalar_lea.sflag [#allocation3], %s189
        %s191 = sand.u32 %s43, 1
        %s192 = smul.addr %s191, 8
        %s193 = scalar_lea.vmem [#allocation2], %s192
        // Predicated region
        $region29: #{tpu_custom_call.1} parent=27 // pred_check
          %p194 = pneg %p56
        $region30: #{tpu_custom_call.1} parent=27 // pred_check_branch
          %196 = sbr.rel (%p194) target = $region32
        $region31: #{tpu_custom_call.1} parent=27 // pred_region
          %197 = dma.done %s190, 128
        $region32: #{tpu_custom_call.1} parent=27 // pred_fallthru
          _
        %s198 = sand.u32 %s43, 1
        %s199 = scalar_lea.sflag [#allocation3], %s198
        %s200 = sand.u32 %s43, 1
        %s201 = smul.addr %s200, 8
        %s202 = scalar_lea.vmem [#allocation2], %s201
        %p203 = pneg %p56
        %p204 = pneg %p53
        %p205 = scmp.lt.s32.totalorder %s25, 1
        %s206 = scalar_select %p205, %s25, 1
        %s207 = smul.addr %s206, 8
        %s208 = scalar_lea.vmem %s1, %s207
        %p209 = pneg %p82
        %p210 = pneg %p79
        %p211 = pneg %p110
        %p212 = pneg %p107
        %s213 = sand.u32 %s97, 1
        %s214 = scalar_lea.sflag [#allocation4], %s213
        %s215 = sand.u32 %s97, 1
        %s216 = smul.addr %s215, 8
        %s217 = scalar_lea.vmem [#allocation5], %s216
        %p218 = pneg %p136
        %p219 = pneg %p133
        %p220 = scmp.lt.s32.totalorder %s25, 1
        %s221 = scalar_select %p220, %s25, 1
        %s222 = smul.addr %s221, 8
        %s223 = scalar_lea.vmem %s3, %s222
        %p224 = scmp.lt.s32.totalorder %s25, 1
        %s225 = scalar_select %p224, %s25, 1
        %s226 = smul.addr %s225, 8
        %s227 = scalar_lea.vmem %s1, %s226
        %p228 = scmp.lt.s32.totalorder %s25, 1
        %s229 = scalar_select %p228, %s25, 1
        %s230 = smul.addr %s229, 8
        %s231 = scalar_lea.vmem %s3, %s230
        %v232 = vld [vmem:[%s193] sm:$0xff]
        %v233 = vld [vmem:[%s227] sm:$0xff]
        %v234 = vlaneseq
        %v235 = vand.u32 %v234, 127
        %s236 = smul.u32 %s26, 128
        %v237 = vstv %s236
        %v238 = vadd.s32 %v235, %v237
        %vm239 = vcmp.ne.s32.totalorder %v233, 0
        %v240 = vlaneseq
        %v241 = vshrl.u32 %v240, 7
        %s242 = smul.u32 %s25, 8
        %v243 = vstv %s242
        %v244 = vadd.s32 %v241, %v243
        %vm245 = vcmp.lt.s32.totalorder %v244, 12
        %vm246 = vmand %vm239, %vm245
        %vm247 = vcmp.ne.s32.totalorder %v238, 0
        %v248 = vsel %vm246, 1, 0
        %249 = vset.pattern.permute.xlu0 0
        %250 = vperm.xlu0 %249, %v248
        %v251 = vpop.permute.xlu0 %250
        %vm252 = vcmp.eq.s32.totalorder %v251, 1
        %vm253 = vmand %vm252, %vm247
        %vm254 = vcmp.lt.s32.totalorder %v238, 300
        %vm255 = vmand %vm253, %vm254
        %256 = vset.pattern.permute.xlu0 0
        %257 = vperm.xlu0 %256, %v233
        %v258 = vpop.permute.xlu0 %257
        %vm259 = vcmp.eq.s32.totalorder %v238, %v258
        %v260 = vsel %vm259, 0.9, 0.00033557048
        %v261 = vsel %vm255, %v260, 0.0
        %v262 = vsel %vm255, %v232, 0.0
        %263 = vst [vmem:[%s217] sm:$0xff] %v261
        %v264 = vmul.f32 %v261, %v262
        %265 = vadd.xlane.f32.xlu0 %v264
        %v266 = vpop.xlane.xlu0 %265
        %v267 = vsub.f32 0.0, %v266
        %p268 = scmp.eq.s32.totalorder %s26, 0
        // Predicated region
        $region33: #{tpu_custom_call.1} parent=27 // pred_check
          %p269 = pneg %p268
        $region34: #{tpu_custom_call.1} parent=27 // pred_check_branch
          %271 = sbr.rel (%p269) target = $region36
        $region35: #{tpu_custom_call.1} parent=27 // pred_region
          %v272 = vsel %vm246, -0.8947923, 0.0
          %vm273 = vcmask 7168
          %274 = vst.msk [vmem:[%s231] sm:$0xff] %vm273, %v272
        $region36: #{tpu_custom_call.1} parent=27 // pred_fallthru
          _
        %v275 = vld [vmem:[%s231] sm:$0xff]
        %v276 = vadd.f32 %v275, %v267
        %vm277 = vcmask 7168
        %278 = vst.msk [vmem:[%s231] sm:$0xff] %vm277, %v276
        %s279 = sand.u32 %s97, 1
        %s280 = scalar_lea.sflag [#allocation4], %s279
        %s281 = sand.u32 %s97, 1
        %s282 = smul.addr %s281, 8
        %s283 = scalar_lea.vmem [#allocation5], %s282
        %p284 = scmp.lt.s32.totalorder %s25, 1
        %s285 = scalar_select %p284, %s25, 1
        %s286 = smul.addr %s285, 8
        %s287 = scalar_lea.vmem %s3, %s286
        // Predicated region
        $region37: #{tpu_custom_call.1} parent=27 // pred_check
          %p288 = pneg %p107
        $region38: #{tpu_custom_call.1} parent=27 // pred_check_branch
          %290 = sbr.rel (%p288) target = $region40
        $region39: #{tpu_custom_call.1} parent=27 // pred_region
          %s292 = ssub.s32 128, 128
          %293 = vsyncadd %s280, %s292
          %s294 = smul.addr %s25, 3
          %s295 = sadd.s32 %s26, %s294
          %s296 = smul.addr %s295, 128
          %s297 = scalar_lea.hbm %s2, %s296
          %s299 = sshll.u32 %s283, 4
          %s300 = int_to_ptr.vmem [resolvable:$true] %s299
          %302 = dma.vmem_to_hbm [thread:$0]  %s300, 128, %s297, %s280
        $region40: #{tpu_custom_call.1} parent=27 // pred_fallthru
          _
        // Predicated region
        $region41: #{tpu_custom_call.1} parent=27 // pred_check
          %p303 = pneg %p133
        $region42: #{tpu_custom_call.1} parent=27 // pred_check_branch
          %305 = sbr.rel (%p303) target = $region44
        $region43: #{tpu_custom_call.1} parent=27 // pred_region
          _
        $region44: #{tpu_custom_call.1} parent=27 // pred_fallthru
          _
      $region28: #{tpu_custom_call.1} parent=5 // pred_fallthru
        _
      %p306 = scmp.le.s32.totalorder 2, %s16
      // Predicated region
      $region45: #{tpu_custom_call.1} parent=5 // pred_check
        %p307 = pneg %p306
      $region46: #{tpu_custom_call.1} parent=5 // pred_check_branch
        %309 = sbr.rel (%p307) target = $region48
      $region47: #{tpu_custom_call.1} parent=5 // pred_region
        %s310 = ssub.s32 %s16, 2
        // Predicated region
        $region49: #{tpu_custom_call.1} parent=47 // pred_check
          %p311 = pneg %p113
        $region50: #{tpu_custom_call.1} parent=47 // pred_check_branch
          %313 = sbr.rel (%p311) target = $region52
        $region51: #{tpu_custom_call.1} parent=47 // pred_region
          %s314 = sand.u32 %s98, 1
          %s315 = scalar_lea.sflag [#allocation4], %s314
          %s316 = sand.u32 %s98, 1
          %s317 = smul.addr %s316, 8
          %s318 = scalar_lea.vmem [#allocation5], %s317
          %319 = dma.done %s315, 128
        $region52: #{tpu_custom_call.1} parent=47 // pred_fallthru
          _
        // Predicated region
        $region53: #{tpu_custom_call.1} parent=47 // pred_check
          %p320 = pneg %p139
        $region54: #{tpu_custom_call.1} parent=47 // pred_check_branch
          %322 = sbr.rel (%p320) target = $region56
        $region55: #{tpu_custom_call.1} parent=47 // pred_region
          %p323 = scmp.lt.s32.totalorder %s27, 1
          %s324 = scalar_select %p323, %s27, 1
          %s325 = smul.addr %s324, 8
          %s326 = scalar_lea.vmem %s3, %s325
        $region56: #{tpu_custom_call.1} parent=47 // pred_fallthru
          _
      $region48: #{tpu_custom_call.1} parent=5 // pred_fallthru
        _
    $region6: #{tpu_custom_call.1} parent=1 // loop_footer
      %s20 = sadd.s32 1, %s16
    $region7: #{tpu_custom_call.1} parent=1 // loop_footer_branch
      %15 = sbr.rel target = $region3
    $region8: #{tpu_custom_call.1} parent=1 // loop_exit
      _
    %327 = vsyncpa [#allocation3], 1
    %s328 = scalar_lea.sflag [#allocation3], 1
    %329 = vsyncpa %s328, 1
    %330 = vsyncpa [#allocation4], 1
    %s331 = scalar_lea.sflag [#allocation4], 1
    %332 = vsyncpa %s331, 1

</llo_original>
